<compile_context>
chip_gen: v7x
topology: tpu7x:2x2x1
jax: 0.10.0
libtpu: 0.0.40
codegen_flags: <defaults>
</compile_context>

<pallas_src>
import functools

import jax
import jax.numpy as jnp
from jax.experimental import pallas as pl
from jax.experimental.pallas import tpu as pltpu


def _score_mlp_kernel(n_hidden, *refs):
    """cat-free MLP: (Linear+ReLU) * (1+n_hidden) -> Linear -> * (1/sigma)."""
    if n_hidden > 0:
        (x_ref, sig_ref, w0x_ref, w0s_ref, b0_ref,
         wh_ref, bh_ref, wo_ref, bo_ref, o_ref) = refs
    else:
        (x_ref, sig_ref, w0x_ref, w0s_ref, b0_ref,
         wo_ref, bo_ref, o_ref) = refs
        wh_ref = bh_ref = None

    x = x_ref[...]                       # [TB, C]  f32
    sig = sig_ref[...]                   # [TB, 1]  f32

    # Input layer: Linear(C+1, H) + ReLU, with sigma folded in as a
    # VPU broadcast-multiply instead of a lane-axis concat.
    h = (jnp.dot(x.astype(jnp.bfloat16), w0x_ref[...],
                 preferred_element_type=jnp.float32)
         + sig * w0s_ref[...] + b0_ref[...])
    h = jnp.maximum(h, 0.0)

    # Hidden layers (static unroll; whole weight stack resident in VMEM).
    # TODO(synk): for large hidden_dim / n_hidden on v7x (64 MiB VMEM), stream
    # per-layer weights with pltpu.emit_pipeline instead of keeping the whole
    # [n_hidden, H, H] stack resident.
    for i in range(n_hidden):
        h = (jnp.dot(h.astype(jnp.bfloat16), wh_ref[i],
                     preferred_element_type=jnp.float32)
             + bh_ref[i])
        h = jnp.maximum(h, 0.0)

    # Output layer, then divide by sigma (reciprocal on EUP, multiply on VPU).
    out = (jnp.dot(h.astype(jnp.bfloat16), wo_ref[...],
                   preferred_element_type=jnp.float32)
           + bo_ref[...])
    o_ref[...] = out * pl.reciprocal(sig, approx=False)
    # TODO(synk): with tiny C the (TB, C) store is a masked vst; a wrapper-side
    # lane-dense repack of the output would remove the masking if writeback
    # ever becomes the bottleneck.


def score_model_forward(x, sigma, params, *, n_hidden, block_b=None):
    """Pallas wrapper. x: [B, C] f32, sigma: [B, 1] f32. Returns [B, C] f32."""
    w0, b0, wh, bh, wo, bo = params
    B, C = x.shape
    H = w0.shape[1]
    assert w0.shape[0] == C + 1

    # Split the first-layer weight: feature rows go to the MXU in bf16; the
    # sigma row stays f32 and is applied as a broadcast multiply-add.
    w0x = w0[:C, :].astype(jnp.bfloat16)             # [C, H]
    w0s = w0[C:, :]                                  # [1, H] f32
    b0_2d = b0.reshape(1, H)
    wo_bf = wo.astype(jnp.bfloat16)                  # [H, C]
    bo_2d = bo.reshape(1, C)

    # Batch tile: multiple of 8 sublanes (f32), capped at 512 rows.
    if block_b is None:
        block_b = min(B, 512)
    block_b = max(8, (min(block_b, B) // 8) * 8)
    grid = (pl.cdiv(B, block_b),)

    in_specs = [
        pl.BlockSpec((block_b, C), lambda i: (i, 0)),    # x      (pipelined)
        pl.BlockSpec((block_b, 1), lambda i: (i, 0)),    # sigma  (pipelined)
        pl.BlockSpec((C, H), lambda i: (0, 0)),          # w0x    (resident)
        pl.BlockSpec((1, H), lambda i: (0, 0)),          # w0 sigma row
        pl.BlockSpec((1, H), lambda i: (0, 0)),          # b0
    ]
    args = [x, sigma, w0x, w0s, b0_2d]

    if n_hidden > 0:                                     # skip DMA entirely if unused
        wh_bf = wh.astype(jnp.bfloat16)                  # [n_hidden, H, H]
        bh_3d = bh.reshape(n_hidden, 1, H)
        in_specs += [
            pl.BlockSpec((n_hidden, H, H), lambda i: (0, 0, 0)),
            pl.BlockSpec((n_hidden, 1, H), lambda i: (0, 0, 0)),
        ]
        args += [wh_bf, bh_3d]

    in_specs += [
        pl.BlockSpec((H, C), lambda i: (0, 0)),          # wo
        pl.BlockSpec((1, C), lambda i: (0, 0)),          # bo
    ]
    args += [wo_bf, bo_2d]

    out_spec = pl.BlockSpec((block_b, C), lambda i: (i, 0))

    # Scoped-VMEM budget: resident weights + double-buffered activation tiles.
    weight_bytes = sum(int(a.size) * a.dtype.itemsize for a in args[2:])
    act_bytes = 4 * block_b * (C + 1 + C)
    vmem_limit = int(min(64 * 1024 * 1024,
                         max(16 * 1024 * 1024,
                             4 * (weight_bytes + act_bytes) + (1 << 20))))

    kernel = functools.partial(_score_mlp_kernel, n_hidden)

    return pl.pallas_call(
        kernel,
        out_shape=jax.ShapeDtypeStruct((B, C), jnp.float32),
        grid=grid,
        in_specs=in_specs,
        out_specs=out_spec,
        compiler_params=pltpu.CompilerParams(
            dimension_semantics=("parallel",),
            vmem_limit_bytes=vmem_limit,
        ),
    )(*args)


def init_params(key, n_channels, hidden_dim, n_hidden):
    """Deterministic init matching nn.Linear shapes (weights stored transposed:
    [in_features, out_features], ready for x @ W)."""
    keys = jax.random.split(key, 6)

    def uniform(k, shape, fan_in):
        bound = 1.0 / jnp.sqrt(fan_in)
        return jax.random.uniform(k, shape, jnp.float32, -bound, bound)

    c_in = n_channels + 1
    w0 = uniform(keys[0], (c_in, hidden_dim), c_in)
    b0 = uniform(keys[1], (1, hidden_dim), c_in)
    if n_hidden > 0:
        wh = uniform(keys[2], (n_hidden, hidden_dim, hidden_dim), hidden_dim)
        bh = uniform(keys[3], (n_hidden, hidden_dim), hidden_dim)
    else:
        wh = jnp.zeros((0, hidden_dim, hidden_dim), jnp.float32)
        bh = jnp.zeros((0, hidden_dim), jnp.float32)
    wo = uniform(keys[4], (hidden_dim, n_channels), hidden_dim)
    bo = uniform(keys[5], (1, n_channels), hidden_dim)
    return (w0, b0, wh, bh, wo, bo)


def reference_forward(x, sigma, params, *, n_hidden):
    """Pure-JAX reference mirroring the PyTorch forward (same bf16 matmul /
    f32-accumulate numerics as the kernel)."""
    w0, b0, wh, bh, wo, bo = params
    C = x.shape[1]
    w0x = w0[:C, :].astype(jnp.bfloat16)
    w0s = w0[C:, :]
    h = (jnp.dot(x.astype(jnp.bfloat16), w0x, preferred_element_type=jnp.float32)
         + sigma * w0s + b0)
    h = jnp.maximum(h, 0.0)
    for i in range(n_hidden):
        h = (jnp.dot(h.astype(jnp.bfloat16), wh[i].astype(jnp.bfloat16),
                     preferred_element_type=jnp.float32)
             + bh[i])
        h = jnp.maximum(h, 0.0)
    out = (jnp.dot(h.astype(jnp.bfloat16), wo.astype(jnp.bfloat16),
                   preferred_element_type=jnp.float32)
           + bo)
    return out / sigma


if __name__ == "__main__":
    # Small config: 2-d samples (mixture of Gaussians in 2-d space), hidden=32.
    # block_b=16 gives a 4-step batch grid so the pipeline is actually exercised.
    B, N_CHANNELS, H_DIM, N_HIDDEN = 64, 2, 32, 2
    BLOCK_B = 16

    key = jax.random.PRNGKey(0)
    k_x, k_s, k_p = jax.random.split(key, 3)

    x = jax.random.normal(k_x, (B, N_CHANNELS), jnp.float32)
    # sigma > 0 (noise strength at time t), one per sample
    sigma = jax.random.uniform(k_s, (B, 1), jnp.float32, 0.1, 1.0)

    params = init_params(k_p, N_CHANNELS, H_DIM, N_HIDDEN)

    out = score_model_forward(x, sigma, params, n_hidden=N_HIDDEN, block_b=BLOCK_B)
    out = jax.block_until_ready(out)

    ref = reference_forward(x, sigma, params, n_hidden=N_HIDDEN)
    assert out.shape == (B, N_CHANNELS)
    assert jnp.allclose(out, ref, atol=1e-3, rtol=1e-3), \
        float(jnp.max(jnp.abs(out - ref)))

    print("KERNEL_OK")
</pallas_src>

<mosaic_0001>
module attributes {stable_mosaic.version = 11 : i64} {
  func.func @_score_mlp_kernel(%arg0: i32, %arg1: memref<16x2xf32, #tpu.memory_space<vmem>>, %arg2: memref<16x1xf32, #tpu.memory_space<vmem>>, %arg3: memref<2x32xbf16, #tpu.memory_space<vmem>>, %arg4: memref<1x32xf32, #tpu.memory_space<vmem>>, %arg5: memref<1x32xf32, #tpu.memory_space<vmem>>, %arg6: memref<2x32x32xbf16, #tpu.memory_space<vmem>>, %arg7: memref<2x1x32xf32, #tpu.memory_space<vmem>>, %arg8: memref<32x2xbf16, #tpu.memory_space<vmem>>, %arg9: memref<1x2xf32, #tpu.memory_space<vmem>>, %arg10: memref<16x2xf32, #tpu.memory_space<vmem>>) attributes {dimension_semantics = [#tpu.dimension_semantics<parallel>], iteration_bounds = array<i64: 4>, scalar_prefetch = 0 : i64, scratch_operands = 0 : i64, tpu.core_type = #tpu.core_type<tc>, window_params = [{transform_indices = @transform_0, window_bounds = array<i64: 16, 2>}, {transform_indices = @transform_1, window_bounds = array<i64: 16, 1>}, {pipeline_mode = #tpu.pipeline_mode<synchronous>, transform_indices = @transform_2, window_bounds = array<i64: 2, 32>}, {pipeline_mode = #tpu.pipeline_mode<synchronous>, transform_indices = @transform_3, window_bounds = array<i64: 1, 32>}, {pipeline_mode = #tpu.pipeline_mode<synchronous>, transform_indices = @transform_4, window_bounds = array<i64: 1, 32>}, {pipeline_mode = #tpu.pipeline_mode<synchronous>, transform_indices = @transform_5, window_bounds = array<i64: 2, 32, 32>}, {pipeline_mode = #tpu.pipeline_mode<synchronous>, transform_indices = @transform_6, window_bounds = array<i64: 2, 1, 32>}, {pipeline_mode = #tpu.pipeline_mode<synchronous>, transform_indices = @transform_7, window_bounds = array<i64: 32, 2>}, {pipeline_mode = #tpu.pipeline_mode<synchronous>, transform_indices = @transform_8, window_bounds = array<i64: 1, 2>}, {transform_indices = @transform_9, window_bounds = array<i64: 16, 2>}]} {
    %c0 = arith.constant 0 : index
    %c0_0 = arith.constant 0 : index
    %0 = vector.load %arg1[%c0, %c0_0] : memref<16x2xf32, #tpu.memory_space<vmem>>, vector<16x2xf32>
    %c0_1 = arith.constant 0 : index
    %c0_2 = arith.constant 0 : index
    %1 = vector.load %arg2[%c0_1, %c0_2] : memref<16x1xf32, #tpu.memory_space<vmem>>, vector<16x1xf32>
    %2 = arith.truncf %0 : vector<16x2xf32> to vector<16x2xbf16>
    %c0_3 = arith.constant 0 : index
    %c0_4 = arith.constant 0 : index
    %3 = vector.load %arg3[%c0_3, %c0_4] : memref<2x32xbf16, #tpu.memory_space<vmem>>, vector<2x32xbf16>
    %cst = arith.constant dense<0.000000e+00> : vector<16x32xf32>
    %4 = tpu.matmul %2, %3, %cst {dimension_numbers = #tpu.dot_dimension_numbers<[1], [0], [0], [1], [0, 0, 1, 1], [], []>} : vector<16x2xbf16>, vector<2x32xbf16>, vector<16x32xf32> -> vector<16x32xf32>
    %c0_5 = arith.constant 0 : index
    %c0_6 = arith.constant 0 : index
    %5 = vector.load %arg4[%c0_5, %c0_6] : memref<1x32xf32, #tpu.memory_space<vmem>>, vector<1x32xf32>
    %6 = vector.broadcast %1 : vector<16x1xf32> to vector<16x32xf32>
    %7 = vector.broadcast %5 : vector<1x32xf32> to vector<16x32xf32>
    %8 = arith.mulf %6, %7 : vector<16x32xf32>
    %9 = arith.addf %4, %8 : vector<16x32xf32>
    %c0_7 = arith.constant 0 : index
    %c0_8 = arith.constant 0 : index
    %10 = vector.load %arg5[%c0_7, %c0_8] : memref<1x32xf32, #tpu.memory_space<vmem>>, vector<1x32xf32>
    %11 = vector.broadcast %10 : vector<1x32xf32> to vector<16x32xf32>
    %12 = arith.addf %9, %11 : vector<16x32xf32>
    %cst_9 = arith.constant 0.000000e+00 : f32
    %13 = vector.broadcast %cst_9 : f32 to vector<16x32xf32>
    %14 = arith.maximumf %12, %13 : vector<16x32xf32>
    %15 = arith.truncf %14 : vector<16x32xf32> to vector<16x32xbf16>
    %c0_10 = arith.constant 0 : index
    %c0_11 = arith.constant 0 : index
    %c0_12 = arith.constant 0 : index
    %16 = vector.load %arg6[%c0_10, %c0_11, %c0_12] : memref<2x32x32xbf16, #tpu.memory_space<vmem>>, vector<1x32x32xbf16>
    %17 = vector.shape_cast %16 : vector<1x32x32xbf16> to vector<32x32xbf16>
    %cst_13 = arith.constant dense<0.000000e+00> : vector<16x32xf32>
    %18 = tpu.matmul %15, %17, %cst_13 {dimension_numbers = #tpu.dot_dimension_numbers<[1], [0], [0], [1], [0, 0, 1, 1], [], []>} : vector<16x32xbf16>, vector<32x32xbf16>, vector<16x32xf32> -> vector<16x32xf32>
    %c0_14 = arith.constant 0 : index
    %c0_15 = arith.constant 0 : index
    %c0_16 = arith.constant 0 : index
    %19 = vector.load %arg7[%c0_14, %c0_15, %c0_16] : memref<2x1x32xf32, #tpu.memory_space<vmem>>, vector<1x1x32xf32>
    %20 = vector.shape_cast %19 : vector<1x1x32xf32> to vector<1x32xf32>
    %21 = vector.broadcast %20 : vector<1x32xf32> to vector<16x32xf32>
    %22 = arith.addf %18, %21 : vector<16x32xf32>
    %cst_17 = arith.constant 0.000000e+00 : f32
    %23 = vector.broadcast %cst_17 : f32 to vector<16x32xf32>
    %24 = arith.maximumf %22, %23 : vector<16x32xf32>
    %25 = arith.truncf %24 : vector<16x32xf32> to vector<16x32xbf16>
    %c1 = arith.constant 1 : index
    %c0_18 = arith.constant 0 : index
    %c0_19 = arith.constant 0 : index
    %26 = vector.load %arg6[%c1, %c0_18, %c0_19] : memref<2x32x32xbf16, #tpu.memory_space<vmem>>, vector<1x32x32xbf16>
    %27 = vector.shape_cast %26 : vector<1x32x32xbf16> to vector<32x32xbf16>
    %cst_20 = arith.constant dense<0.000000e+00> : vector<16x32xf32>
    %28 = tpu.matmul %25, %27, %cst_20 {dimension_numbers = #tpu.dot_dimension_numbers<[1], [0], [0], [1], [0, 0, 1, 1], [], []>} : vector<16x32xbf16>, vector<32x32xbf16>, vector<16x32xf32> -> vector<16x32xf32>
    %c1_21 = arith.constant 1 : index
    %c0_22 = arith.constant 0 : index
    %c0_23 = arith.constant 0 : index
    %29 = vector.load %arg7[%c1_21, %c0_22, %c0_23] : memref<2x1x32xf32, #tpu.memory_space<vmem>>, vector<1x1x32xf32>
    %30 = vector.shape_cast %29 : vector<1x1x32xf32> to vector<1x32xf32>
    %31 = vector.broadcast %30 : vector<1x32xf32> to vector<16x32xf32>
    %32 = arith.addf %28, %31 : vector<16x32xf32>
    %cst_24 = arith.constant 0.000000e+00 : f32
    %33 = vector.broadcast %cst_24 : f32 to vector<16x32xf32>
    %34 = arith.maximumf %32, %33 : vector<16x32xf32>
    %35 = arith.truncf %34 : vector<16x32xf32> to vector<16x32xbf16>
    %c0_25 = arith.constant 0 : index
    %c0_26 = arith.constant 0 : index
    %36 = vector.load %arg8[%c0_25, %c0_26] : memref<32x2xbf16, #tpu.memory_space<vmem>>, vector<32x2xbf16>
    %cst_27 = arith.constant dense<0.000000e+00> : vector<16x2xf32>
    %37 = tpu.matmul %35, %36, %cst_27 {dimension_numbers = #tpu.dot_dimension_numbers<[1], [0], [0], [1], [0, 0, 1, 1], [], []>} : vector<16x32xbf16>, vector<32x2xbf16>, vector<16x2xf32> -> vector<16x2xf32>
    %c0_28 = arith.constant 0 : index
    %c0_29 = arith.constant 0 : index
    %38 = vector.load %arg9[%c0_28, %c0_29] : memref<1x2xf32, #tpu.memory_space<vmem>>, vector<1x2xf32>
    %39 = vector.broadcast %38 : vector<1x2xf32> to vector<16x2xf32>
    %40 = arith.addf %37, %39 : vector<16x2xf32>
    %41 = tpu.reciprocal %1 : vector<16x1xf32> -> vector<16x1xf32>
    %42 = vector.broadcast %41 : vector<16x1xf32> to vector<16x2xf32>
    %43 = arith.mulf %40, %42 : vector<16x2xf32>
    %c0_30 = arith.constant 0 : index
    %c0_31 = arith.constant 0 : index
    %44 = vector.load %arg10[%c0_30, %c0_31] : memref<16x2xf32, #tpu.memory_space<vmem>>, vector<16x2xf32>
    tpu.vector_store %arg10[%c0_30, %c0_31], %43 {strides = array<i32>} : memref<16x2xf32, #tpu.memory_space<vmem>>, vector<16x2xf32>,
    return
  }
  func.func @transform_0(%arg0: i32) -> (i32, i32) {
    %c0_i32 = arith.constant 0 : i32
    %c0_i32_0 = arith.constant 0 : i32
    return %arg0, %c0_i32 : i32, i32
  }
  func.func @transform_1(%arg0: i32) -> (i32, i32) {
    %c0_i32 = arith.constant 0 : i32
    %c0_i32_0 = arith.constant 0 : i32
    return %arg0, %c0_i32 : i32, i32
  }
  func.func @transform_2(%arg0: i32) -> (i32, i32) {
    %c0_i32 = arith.constant 0 : i32
    %c0_i32_0 = arith.constant 0 : i32
    %c0_i32_1 = arith.constant 0 : i32
    return %c0_i32, %c0_i32_0 : i32, i32
  }
  func.func @transform_3(%arg0: i32) -> (i32, i32) {
    %c0_i32 = arith.constant 0 : i32
    %c0_i32_0 = arith.constant 0 : i32
    %c0_i32_1 = arith.constant 0 : i32
    return %c0_i32, %c0_i32_0 : i32, i32
  }
  func.func @transform_4(%arg0: i32) -> (i32, i32) {
    %c0_i32 = arith.constant 0 : i32
    %c0_i32_0 = arith.constant 0 : i32
    %c0_i32_1 = arith.constant 0 : i32
    return %c0_i32, %c0_i32_0 : i32, i32
  }
  func.func @transform_5(%arg0: i32) -> (i32, i32, i32) {
    %c0_i32 = arith.constant 0 : i32
    %c0_i32_0 = arith.constant 0 : i32
    %c0_i32_1 = arith.constant 0 : i32
    %c0_i32_2 = arith.constant 0 : i32
    return %c0_i32, %c0_i32_0, %c0_i32_1 : i32, i32, i32
  }
  func.func @transform_6(%arg0: i32) -> (i32, i32, i32) {
    %c0_i32 = arith.constant 0 : i32
    %c0_i32_0 = arith.constant 0 : i32
    %c0_i32_1 = arith.constant 0 : i32
    %c0_i32_2 = arith.constant 0 : i32
    return %c0_i32, %c0_i32_0, %c0_i32_1 : i32, i32, i32
  }
  func.func @transform_7(%arg0: i32) -> (i32, i32) {
    %c0_i32 = arith.constant 0 : i32
    %c0_i32_0 = arith.constant 0 : i32
    %c0_i32_1 = arith.constant 0 : i32
    return %c0_i32, %c0_i32_0 : i32, i32
  }
  func.func @transform_8(%arg0: i32) -> (i32, i32) {
    %c0_i32 = arith.constant 0 : i32
    %c0_i32_0 = arith.constant 0 : i32
    %c0_i32_1 = arith.constant 0 : i32
    return %c0_i32, %c0_i32_0 : i32, i32
  }
  func.func @transform_9(%arg0: i32) -> (i32, i32) {
    %c0_i32 = arith.constant 0 : i32
    %c0_i32_0 = arith.constant 0 : i32
    return %arg0, %c0_i32 : i32, i32
  }
}

</mosaic_0001>

<llo_original>
// kernel: tpu_custom_call.1
$region0: #{tpu_custom_call.1}
  #allocation0 [shape = 'u32[]', space=smem, size = 0x4, offset = 0x4, fixed_abs, tag = 'smem constant byte address 0x4 - core index']
  #allocation1 [shape = 'u32[144,128]{1,0:T(1,128)}', space=vmem, size = 0x12000, scoped, tag = 'internal scratch']
  %s0 = inlined_call_operand.vmem [shape: f32[64,2], index: 0, kind: input, shape index: {}]
  %s1 = inlined_call_operand.vmem [shape: f32[64,1], index: 1, kind: input, shape index: {}]
  %s2 = inlined_call_operand.vmem [shape: bf16[2,32], index: 2, kind: input, shape index: {}]
  %s3 = inlined_call_operand.vmem [shape: f32[1,32], index: 3, kind: input, shape index: {}]
  %s4 = inlined_call_operand.vmem [shape: f32[1,32], index: 4, kind: input, shape index: {}]
  %s5 = inlined_call_operand.vmem [shape: bf16[2,32,32], index: 5, kind: input, shape index: {}]
  %s6 = inlined_call_operand.vmem [shape: f32[2,1,32], index: 6, kind: input, shape index: {}]
  %s7 = inlined_call_operand.vmem [shape: bf16[32,2], index: 7, kind: input, shape index: {}]
  %s8 = inlined_call_operand.vmem [shape: f32[1,2], index: 8, kind: input, shape index: {}]
  %s9 = inlined_call_operand.vmem [shape: f32[64,2], index: 9, kind: output, shape index: {}]
  %s10 = sld [smem:[#allocation0]]
  $region69: #{tpu_custom_call.1} parent=0
    _
  %s12 = ssub.s32 1, %s10
  %s13 = scalar_select 0, %s12, %s10
  loop: start=0, step=1, limit=6
  $region2: #{tpu_custom_call.1} parent=0 // loop_pre_header
    _
  $region3: #{tpu_custom_call.1} parent=0 // loop_header
    %s15 = sphi 0, %s19
    %p16 = scmp.ge.s32.totalorder %s15, 6
    %s25 = sphi 0, %s27
    %s28 = sphi 0, %s25
    %s29 = sphi 0, %s28
    %s45 = sphi 0, %s29
    %s51 = sphi 0, %s53
    %s54 = sphi 0, %s51
    %s55 = sphi 0, %s54
    %s71 = sphi 0, %s55
    %s75 = sphi 0, %s75
    %s77 = sphi 0, %s75
    %s78 = sphi 0, %s77
    %s92 = sphi 0, %s78
    %s96 = sphi 0, %s96
    %s98 = sphi 0, %s96
    %s99 = sphi 0, %s98
    %s113 = sphi 0, %s99
    %s117 = sphi 0, %s117
    %s119 = sphi 0, %s117
    %s120 = sphi 0, %s119
    %s134 = sphi 0, %s120
    %s138 = sphi 0, %s138
    %s140 = sphi 0, %s138
    %s141 = sphi 0, %s140
    %s155 = sphi 0, %s141
    %s159 = sphi 0, %s159
    %s161 = sphi 0, %s159
    %s162 = sphi 0, %s161
    %s176 = sphi 0, %s162
    %s180 = sphi 0, %s180
    %s182 = sphi 0, %s180
    %s183 = sphi 0, %s182
    %s197 = sphi 0, %s183
    %s201 = sphi 0, %s201
    %s203 = sphi 0, %s201
    %s204 = sphi 0, %s203
    %s218 = sphi 0, %s204
    %s224 = sphi 0, %s226
    %s227 = sphi 0, %s224
    %s228 = sphi 0, %s227
    %s244 = sphi 0, %s228
  $region4: #{tpu_custom_call.1} parent=0 // loop_header_branch
    %18 = sbr.rel (%p16) target = $region8
  $region5: #{tpu_custom_call.1} parent=0 // loop_body
    %s20 = ssub.s32 %s15, 1
    %s21 = ssub.s32 %s15, 2
    %s22 = sadd.s32 %s15, 1
    %s23 = ssub.s32 %s15, %s22
    %p24 = scmp.eq.s32.totalorder %s23, 0
    %s26 = sadd.s32 %s25, 1
    %s27 = scalar_select %p24, %s25, %s26
    %p30 = pneg %p24
    %p31 = scmp.eq.s32.totalorder %s15, 3
    %p32 = por %p30, %p31
    %p33 = scmp.ne.s32.totalorder %s25, %s28
    %p34 = scmp.eq.s32.totalorder %s15, 0
    %p35 = por %p33, %p34
    %p36 = scmp.ne.s32.totalorder %s25, %s28
    %p37 = scmp.eq.s32.totalorder %s20, 3
    %p38 = por %p36, %p37
    %p39 = scmp.ne.s32.totalorder %s28, %s29
    %p40 = scmp.eq.s32.totalorder %s20, 0
    %p41 = por %p39, %p40
    %p42 = scmp.ne.s32.totalorder %s28, %s29
    %p43 = scmp.eq.s32.totalorder %s21, 3
    %p44 = por %p42, %p43
    %p46 = scmp.ne.s32.totalorder %s29, %s45
    %p47 = scmp.eq.s32.totalorder %s21, 0
    %p48 = por %p46, %p47
    %s49 = ssub.s32 %s15, %s22
    %p50 = scmp.eq.s32.totalorder %s49, 0
    %s52 = sadd.s32 %s51, 1
    %s53 = scalar_select %p50, %s51, %s52
    %p56 = pneg %p50
    %p57 = scmp.eq.s32.totalorder %s15, 3
    %p58 = por %p56, %p57
    %p59 = scmp.ne.s32.totalorder %s51, %s54
    %p60 = scmp.eq.s32.totalorder %s15, 0
    %p61 = por %p59, %p60
    %p62 = scmp.ne.s32.totalorder %s51, %s54
    %p63 = scmp.eq.s32.totalorder %s20, 3
    %p64 = por %p62, %p63
    %p65 = scmp.ne.s32.totalorder %s54, %s55
    %p66 = scmp.eq.s32.totalorder %s20, 0
    %p67 = por %p65, %p66
    %p68 = scmp.ne.s32.totalorder %s54, %s55
    %p69 = scmp.eq.s32.totalorder %s21, 3
    %p70 = por %p68, %p69
    %p72 = scmp.ne.s32.totalorder %s55, %s71
    %p73 = scmp.eq.s32.totalorder %s21, 0
    %p74 = por %p72, %p73
    %s76 = sadd.s32 %s75, 1
    %p79 = scmp.eq.s32.totalorder %s15, 3
    %p80 = scmp.ne.s32.totalorder %s75, %s77
    %p81 = scmp.eq.s32.totalorder %s15, 0
    %p82 = por %p80, %p81
    %p83 = scmp.ne.s32.totalorder %s75, %s77
    %p84 = scmp.eq.s32.totalorder %s20, 3
    %p85 = por %p83, %p84
    %p86 = scmp.ne.s32.totalorder %s77, %s78
    %p87 = scmp.eq.s32.totalorder %s20, 0
    %p88 = por %p86, %p87
    %p89 = scmp.ne.s32.totalorder %s77, %s78
    %p90 = scmp.eq.s32.totalorder %s21, 3
    %p91 = por %p89, %p90
    %p93 = scmp.ne.s32.totalorder %s78, %s92
    %p94 = scmp.eq.s32.totalorder %s21, 0
    %p95 = por %p93, %p94
    %s97 = sadd.s32 %s96, 1
    %p100 = scmp.eq.s32.totalorder %s15, 3
    %p101 = scmp.ne.s32.totalorder %s96, %s98
    %p102 = scmp.eq.s32.totalorder %s15, 0
    %p103 = por %p101, %p102
    %p104 = scmp.ne.s32.totalorder %s96, %s98
    %p105 = scmp.eq.s32.totalorder %s20, 3
    %p106 = por %p104, %p105
    %p107 = scmp.ne.s32.totalorder %s98, %s99
    %p108 = scmp.eq.s32.totalorder %s20, 0
    %p109 = por %p107, %p108
    %p110 = scmp.ne.s32.totalorder %s98, %s99
    %p111 = scmp.eq.s32.totalorder %s21, 3
    %p112 = por %p110, %p111
    %p114 = scmp.ne.s32.totalorder %s99, %s113
    %p115 = scmp.eq.s32.totalorder %s21, 0
    %p116 = por %p114, %p115
    %s118 = sadd.s32 %s117, 1
    %p121 = scmp.eq.s32.totalorder %s15, 3
    %p122 = scmp.ne.s32.totalorder %s117, %s119
    %p123 = scmp.eq.s32.totalorder %s15, 0
    %p124 = por %p122, %p123
    %p125 = scmp.ne.s32.totalorder %s117, %s119
    %p126 = scmp.eq.s32.totalorder %s20, 3
    %p127 = por %p125, %p126
    %p128 = scmp.ne.s32.totalorder %s119, %s120
    %p129 = scmp.eq.s32.totalorder %s20, 0
    %p130 = por %p128, %p129
    %p131 = scmp.ne.s32.totalorder %s119, %s120
    %p132 = scmp.eq.s32.totalorder %s21, 3
    %p133 = por %p131, %p132
    %p135 = scmp.ne.s32.totalorder %s120, %s134
    %p136 = scmp.eq.s32.totalorder %s21, 0
    %p137 = por %p135, %p136
    %s139 = sadd.s32 %s138, 1
    %p142 = scmp.eq.s32.totalorder %s15, 3
    %p143 = scmp.ne.s32.totalorder %s138, %s140
    %p144 = scmp.eq.s32.totalorder %s15, 0
    %p145 = por %p143, %p144
    %p146 = scmp.ne.s32.totalorder %s138, %s140
    %p147 = scmp.eq.s32.totalorder %s20, 3
    %p148 = por %p146, %p147
    %p149 = scmp.ne.s32.totalorder %s140, %s141
    %p150 = scmp.eq.s32.totalorder %s20, 0
    %p151 = por %p149, %p150
    %p152 = scmp.ne.s32.totalorder %s140, %s141
    %p153 = scmp.eq.s32.totalorder %s21, 3
    %p154 = por %p152, %p153
    %p156 = scmp.ne.s32.totalorder %s141, %s155
    %p157 = scmp.eq.s32.totalorder %s21, 0
    %p158 = por %p156, %p157
    %s160 = sadd.s32 %s159, 1
    %p163 = scmp.eq.s32.totalorder %s15, 3
    %p164 = scmp.ne.s32.totalorder %s159, %s161
    %p165 = scmp.eq.s32.totalorder %s15, 0
    %p166 = por %p164, %p165
    %p167 = scmp.ne.s32.totalorder %s159, %s161
    %p168 = scmp.eq.s32.totalorder %s20, 3
    %p169 = por %p167, %p168
    %p170 = scmp.ne.s32.totalorder %s161, %s162
    %p171 = scmp.eq.s32.totalorder %s20, 0
    %p172 = por %p170, %p171
    %p173 = scmp.ne.s32.totalorder %s161, %s162
    %p174 = scmp.eq.s32.totalorder %s21, 3
    %p175 = por %p173, %p174
    %p177 = scmp.ne.s32.totalorder %s162, %s176
    %p178 = scmp.eq.s32.totalorder %s21, 0
    %p179 = por %p177, %p178
    %s181 = sadd.s32 %s180, 1
    %p184 = scmp.eq.s32.totalorder %s15, 3
    %p185 = scmp.ne.s32.totalorder %s180, %s182
    %p186 = scmp.eq.s32.totalorder %s15, 0
    %p187 = por %p185, %p186
    %p188 = scmp.ne.s32.totalorder %s180, %s182
    %p189 = scmp.eq.s32.totalorder %s20, 3
    %p190 = por %p188, %p189
    %p191 = scmp.ne.s32.totalorder %s182, %s183
    %p192 = scmp.eq.s32.totalorder %s20, 0
    %p193 = por %p191, %p192
    %p194 = scmp.ne.s32.totalorder %s182, %s183
    %p195 = scmp.eq.s32.totalorder %s21, 3
    %p196 = por %p194, %p195
    %p198 = scmp.ne.s32.totalorder %s183, %s197
    %p199 = scmp.eq.s32.totalorder %s21, 0
    %p200 = por %p198, %p199
    %s202 = sadd.s32 %s201, 1
    %p205 = scmp.eq.s32.totalorder %s15, 3
    %p206 = scmp.ne.s32.totalorder %s201, %s203
    %p207 = scmp.eq.s32.totalorder %s15, 0
    %p208 = por %p206, %p207
    %p209 = scmp.ne.s32.totalorder %s201, %s203
    %p210 = scmp.eq.s32.totalorder %s20, 3
    %p211 = por %p209, %p210
    %p212 = scmp.ne.s32.totalorder %s203, %s204
    %p213 = scmp.eq.s32.totalorder %s20, 0
    %p214 = por %p212, %p213
    %p215 = scmp.ne.s32.totalorder %s203, %s204
    %p216 = scmp.eq.s32.totalorder %s21, 3
    %p217 = por %p215, %p216
    %p219 = scmp.ne.s32.totalorder %s204, %s218
    %p220 = scmp.eq.s32.totalorder %s21, 0
    %p221 = por %p219, %p220
    %s222 = ssub.s32 %s15, %s22
    %p223 = scmp.eq.s32.totalorder %s222, 0
    %s225 = sadd.s32 %s224, 1
    %s226 = scalar_select %p223, %s224, %s225
    %p229 = pneg %p223
    %p230 = scmp.eq.s32.totalorder %s15, 3
    %p231 = por %p229, %p230
    %p232 = scmp.ne.s32.totalorder %s224, %s227
    %p233 = scmp.eq.s32.totalorder %s15, 0
    %p234 = por %p232, %p233
    %p235 = scmp.ne.s32.totalorder %s224, %s227
    %p236 = scmp.eq.s32.totalorder %s20, 3
    %p237 = por %p235, %p236
    %p238 = scmp.ne.s32.totalorder %s227, %s228
    %p239 = scmp.eq.s32.totalorder %s20, 0
    %p240 = por %p238, %p239
    %p241 = scmp.ne.s32.totalorder %s227, %s228
    %p242 = scmp.eq.s32.totalorder %s21, 3
    %p243 = por %p241, %p242
    %p245 = scmp.ne.s32.totalorder %s228, %s244
    %p246 = scmp.eq.s32.totalorder %s21, 0
    %p247 = por %p245, %p246
    %p248 = scmp.le.s32.totalorder 1, %s15
    %p249 = scmp.lt.s32.totalorder %s15, 5
    %p250 = pnand %p248, %p249
    %p251 = pneg %p250
    // Predicated region
    $region9: #{tpu_custom_call.1} parent=5 // pred_check
      _
    $region10: #{tpu_custom_call.1} parent=5 // pred_check_branch
      %253 = sbr.rel (%p250) target = $region12
    $region11: #{tpu_custom_call.1} parent=5 // pred_region
      %s254 = ssub.s32 %s15, 1
      // Predicated region
      $region13: #{tpu_custom_call.1} parent=11 // pred_check
        %p255 = pneg %p88
      $region14: #{tpu_custom_call.1} parent=11 // pred_check_branch
        %257 = sbr.rel (%p255) target = $region16
      $region15: #{tpu_custom_call.1} parent=11 // pred_region
        _
      $region16: #{tpu_custom_call.1} parent=11 // pred_fallthru
        _
      // Predicated region
      $region17: #{tpu_custom_call.1} parent=11 // pred_check
        %p258 = pneg %p109
      $region18: #{tpu_custom_call.1} parent=11 // pred_check_branch
        %260 = sbr.rel (%p258) target = $region20
      $region19: #{tpu_custom_call.1} parent=11 // pred_region
        _
      $region20: #{tpu_custom_call.1} parent=11 // pred_fallthru
        _
      // Predicated region
      $region21: #{tpu_custom_call.1} parent=11 // pred_check
        %p261 = pneg %p130
      $region22: #{tpu_custom_call.1} parent=11 // pred_check_branch
        %263 = sbr.rel (%p261) target = $region24
      $region23: #{tpu_custom_call.1} parent=11 // pred_region
        _
      $region24: #{tpu_custom_call.1} parent=11 // pred_fallthru
        _
      // Predicated region
      $region25: #{tpu_custom_call.1} parent=11 // pred_check
        %p264 = pneg %p151
      $region26: #{tpu_custom_call.1} parent=11 // pred_check_branch
        %266 = sbr.rel (%p264) target = $region28
      $region27: #{tpu_custom_call.1} parent=11 // pred_region
        _
      $region28: #{tpu_custom_call.1} parent=11 // pred_fallthru
        _
      // Predicated region
      $region29: #{tpu_custom_call.1} parent=11 // pred_check
        %p267 = pneg %p172
      $region30: #{tpu_custom_call.1} parent=11 // pred_check_branch
        %269 = sbr.rel (%p267) target = $region32
      $region31: #{tpu_custom_call.1} parent=11 // pred_region
        _
      $region32: #{tpu_custom_call.1} parent=11 // pred_fallthru
        _
      // Predicated region
      $region33: #{tpu_custom_call.1} parent=11 // pred_check
        %p270 = pneg %p193
      $region34: #{tpu_custom_call.1} parent=11 // pred_check_branch
        %272 = sbr.rel (%p270) target = $region36
      $region35: #{tpu_custom_call.1} parent=11 // pred_region
        _
      $region36: #{tpu_custom_call.1} parent=11 // pred_fallthru
        _
      // Predicated region
      $region37: #{tpu_custom_call.1} parent=11 // pred_check
        %p273 = pneg %p214
      $region38: #{tpu_custom_call.1} parent=11 // pred_check_branch
        %275 = sbr.rel (%p273) target = $region40
      $region39: #{tpu_custom_call.1} parent=11 // pred_region
        _
      $region40: #{tpu_custom_call.1} parent=11 // pred_fallthru
        _
    $region12: #{tpu_custom_call.1} parent=5 // pred_fallthru
      _
    %p276 = scmp.lt.s32.totalorder %s15, 4
    // Predicated region
    $region41: #{tpu_custom_call.1} parent=5 // pred_check
      %p277 = pneg %p276
    $region42: #{tpu_custom_call.1} parent=5 // pred_check_branch
      %279 = sbr.rel (%p277) target = $region44
    $region43: #{tpu_custom_call.1} parent=5 // pred_region
      // Predicated region
      $region45: #{tpu_custom_call.1} parent=43 // pred_check
        %p280 = pneg %p35
      $region46: #{tpu_custom_call.1} parent=43 // pred_check_branch
        %282 = sbr.rel (%p280) target = $region48
      $region47: #{tpu_custom_call.1} parent=43 // pred_region
        %s283 = smul.u32 2, %s15
        %p284 = scmp.lt.s32.totalorder %s283, 7
        %s285 = scalar_select %p284, %s283, 7
        %s286 = smul.addr %s285, 8
        %s287 = scalar_lea.vmem %s0, %s286
        %s288 = smul.u32 2, %s15
      $region48: #{tpu_custom_call.1} parent=43 // pred_fallthru
        _
      // Predicated region
      $region49: #{tpu_custom_call.1} parent=43 // pred_check
        %p289 = pneg %p61
      $region50: #{tpu_custom_call.1} parent=43 // pred_check_branch
        %291 = sbr.rel (%p289) target = $region52
      $region51: #{tpu_custom_call.1} parent=43 // pred_region
        %s292 = smul.u32 2, %s15
        %p293 = scmp.lt.s32.totalorder %s292, 7
        %s294 = scalar_select %p293, %s292, 7
        %s295 = smul.addr %s294, 8
        %s296 = scalar_lea.vmem %s1, %s295
        %s297 = smul.u32 2, %s15
      $region52: #{tpu_custom_call.1} parent=43 // pred_fallthru
        _
    $region44: #{tpu_custom_call.1} parent=5 // pred_fallthru
      _
    %p298 = scmp.le.s32.totalorder 1, %s15
    %p299 = scmp.lt.s32.totalorder %s15, 5
    %p300 = pnand %p298, %p299
    %p301 = pneg %p300
    // Predicated region
    $region53: #{tpu_custom_call.1} parent=5 // pred_check
      _
    $region54: #{tpu_custom_call.1} parent=5 // pred_check_branch
      %303 = sbr.rel (%p300) target = $region56
    $region55: #{tpu_custom_call.1} parent=5 // pred_region
      %s304 = ssub.s32 %s15, 1
      %s305 = smul.u32 2, %s20
      %p306 = scmp.lt.s32.totalorder %s305, 7
      %s307 = scalar_select %p306, %s305, 7
      %s308 = smul.addr %s307, 8
      %s309 = scalar_lea.vmem %s0, %s308
      %p310 = pneg %p41
      %p311 = pneg %p38
      %s312 = smul.u32 2, %s20
      %p313 = scmp.lt.s32.totalorder %s312, 7
      %s314 = scalar_select %p313, %s312, 7
      %s315 = smul.addr %s314, 8
      %s316 = scalar_lea.vmem %s1, %s315
      %p317 = pneg %p67
      %p318 = pneg %p64
      %p319 = pneg %p88
      %p320 = pneg %p85
      %p321 = pneg %p109
      %p322 = pneg %p106
      %p323 = pneg %p130
      %p324 = pneg %p127
      %p325 = pneg %p151
      %p326 = pneg %p148
      %p327 = pneg %p172
      %p328 = pneg %p169
      %p329 = pneg %p193
      %p330 = pneg %p190
      %p331 = pneg %p214
      %p332 = pneg %p211
      %p333 = pneg %p240
      %p334 = pneg %p237
      %s335 = smul.u32 2, %s20
      %p336 = scmp.lt.s32.totalorder %s335, 7
      %s337 = scalar_select %p336, %s335, 7
      %s338 = smul.addr %s337, 8
      %s339 = scalar_lea.vmem %s9, %s338
      %s340 = smul.u32 2, %s20
      %p341 = scmp.lt.s32.totalorder %s340, 7
      %s342 = scalar_select %p341, %s340, 7
      %s343 = smul.addr %s342, 8
      %s344 = scalar_lea.vmem %s0, %s343
      %s345 = smul.u32 2, %s20
      %s346 = smul.u32 2, %s20
      %p347 = scmp.lt.s32.totalorder %s346, 7
      %s348 = scalar_select %p347, %s346, 7
      %s349 = smul.addr %s348, 8
      %s350 = scalar_lea.vmem %s1, %s349
      %s351 = smul.u32 2, %s20
      %s352 = smul.u32 2, %s20
      %p353 = scmp.lt.s32.totalorder %s352, 7
      %s354 = scalar_select %p353, %s352, 7
      %s355 = smul.addr %s354, 8
      %s356 = scalar_lea.vmem %s9, %s355
      %s357 = smul.u32 2, %s20
      %v359 = vld [vmem:[%s344] sm:$0xff]
      %v360 = vld [vmem:[%s344 + $0x8] sm:$0xff]
      %v361 = vld [vmem:[%s350] sm:$0xff]
      %v362 = vld [vmem:[%s350 + $0x8] sm:$0xff]
      %v363 = vpack.c.bf16 %v360, %v359
      %v364 = vld [vmem:[%s2] sm:$0x1]
      %v365 = vld [vmem:[%s3] sm:$0x1]
      %367 = vset.pattern.permute.xlu0 0
      %368 = vperm.xlu0 %367, %v361
      %v369 = vpop.permute.xlu0 %368
      %372 = vset.pattern.permute.xlu0 0
      %373 = vperm.xlu0 %372, %v362
      %v374 = vpop.permute.xlu0 %373
      %v377 = vlaneseq
      %v378 = vshrl.u32 %v377, 7
      %v379 = vsub.s32 0, %v378
      %v380 = vrot.slane %v365, %v379
      %v382 = vmul.f32 %v369, %v380
      %v383 = vmul.f32 %v374, %v380
      %vm384 = vcmask 15360
      %v386 = vsel %vm384, %v363, 0
      %vm388 = vcmask 1040384
      %v390 = vsel %vm388, %v364, 0
      %392 = vmatprep.subr.bf16.mxu0 0
      %393 = vmatpush1.bf16.msra.mxu0 %v390
      %394 = vmatprep.subr.bf16.mxu0 0
      %395 = vmatpush1.bf16.msra.mxu0 0
      %396 = vmatprep.subr.bf16.mxu0 0
      %397 = vmatpush1.bf16.msra.mxu0 0
      %398 = vmatprep.subr.bf16.mxu0 0
      %399 = vmatpush1.bf16.msra.mxu0 0
      %400 = vmatprep.subr.bf16.mxu0 0
      %401 = vmatpush1.bf16.msra.mxu0 0
      %402 = vmatprep.subr.bf16.mxu0 0
      %403 = vmatpush1.bf16.msra.mxu0 0
      %404 = vmatprep.subr.bf16.mxu0 0
      %405 = vmatpush1.bf16.msra.mxu0 0
      %406 = vmatprep.subr.bf16.mxu0 0
      %407 = vmatpush1.bf16.msra.mxu0 0
      %408 = vmatprep.subr.bf16.mxu0 0
      %409 = vmatpush1.bf16.msra.mxu0 0
      %410 = vmatprep.subr.bf16.mxu0 0
      %411 = vmatpush1.bf16.msra.mxu0 0
      %412 = vmatprep.subr.bf16.mxu0 0
      %413 = vmatpush1.bf16.msra.mxu0 0
      %414 = vmatprep.subr.bf16.mxu0 0
      %415 = vmatpush1.bf16.msra.mxu0 0
      %416 = vmatprep.subr.bf16.mxu0 0
      %417 = vmatpush1.bf16.msra.mxu0 0
      %418 = vmatprep.subr.bf16.mxu0 0
      %419 = vmatpush1.bf16.msra.mxu0 0
      %420 = vmatprep.subr.bf16.mxu0 0
      %421 = vmatpush1.bf16.msra.mxu0 0
      %422 = vmatprep.subr.bf16.mxu0 0
      %423 = vmatpush1.bf16.msra.mxu0 0
      %424 = vmatprep.mubr.bf16.mxu0 0
      %425 = vmatmul.mubr.bf16.gmra.mrb[0].mxu0 %v386
      %v426 = vpop.f32.mrb[0].mxu0
      %v427 = vadd.f32 %v382, %v426
      %v428 = vpop.f32.mrb[0].mxu0
      %v429 = vpop.f32.mrb[0].mxu0
      %v430 = vadd.f32 %v383, %v429
      %v431 = vpop.f32.mrb[0].mxu0
      %432 = vdwg.mxu0
      %v433 = vld [vmem:[%s4] sm:$0x1]
      %v435 = vlaneseq
      %v436 = vshrl.u32 %v435, 7
      %v437 = vsub.s32 0, %v436
      %v438 = vrot.slane %v433, %v437
      %v440 = vadd.f32 %v427, %v438
      %v441 = vadd.f32 %v430, %v438
      %v442 = vmax.f32 %v440, 0.0
      %v443 = vmax.f32 %v441, 0.0
      %v444 = vpack.c.bf16 %v443, %v442
      %v445 = vld [vmem:[%s5] sm:$0xf]
      %v446 = vld [vmem:[%s5 + $0x4] sm:$0xf]
      %v447 = vld [vmem:[%s5 + $0x8] sm:$0xf]
      %v448 = vld [vmem:[%s5 + $0xc] sm:$0xf]
      %v449 = vld [vmem:[%s6] sm:$0x1]
      %v451 = vlaneseq
      %v452 = vshrl.u32 %v451, 7
      %v453 = vsub.s32 0, %v452
      %v454 = vrot.slane %v449, %v453
      %v460 = vunpack.c.l.b16 %v445
      %v461 = vunpack.c.l.b16 %v446
      %v462 = vunpack.c.l.b16 %v447
      %v463 = vunpack.c.l.b16 %v448
      %v464 = vpack.c.b16 %v461, %v460
      %v465 = vpack.c.b16 %v463, %v462
      %vm468 = vcmask 261120
      %v470 = vsel %vm468, %v444, 0
      %472 = vmatprep.subr.bf16.mxu0 0
      %473 = vmatpush1.bf16.msra.mxu0 %v464
      %474 = vmatprep.subr.bf16.mxu0 0
      %475 = vmatpush1.bf16.msra.mxu0 %v465
      %476 = vmatprep.subr.bf16.mxu0 0
      %477 = vmatpush1.bf16.msra.mxu0 0
      %478 = vmatprep.subr.bf16.mxu0 0
      %479 = vmatpush1.bf16.msra.mxu0 0
      %480 = vmatprep.subr.bf16.mxu0 0
      %481 = vmatpush1.bf16.msra.mxu0 0
      %482 = vmatprep.subr.bf16.mxu0 0
      %483 = vmatpush1.bf16.msra.mxu0 0
      %484 = vmatprep.subr.bf16.mxu0 0
      %485 = vmatpush1.bf16.msra.mxu0 0
      %486 = vmatprep.subr.bf16.mxu0 0
      %487 = vmatpush1.bf16.msra.mxu0 0
      %488 = vmatprep.subr.bf16.mxu0 0
      %489 = vmatpush1.bf16.msra.mxu0 0
      %490 = vmatprep.subr.bf16.mxu0 0
      %491 = vmatpush1.bf16.msra.mxu0 0
      %492 = vmatprep.subr.bf16.mxu0 0
      %493 = vmatpush1.bf16.msra.mxu0 0
      %494 = vmatprep.subr.bf16.mxu0 0
      %495 = vmatpush1.bf16.msra.mxu0 0
      %496 = vmatprep.subr.bf16.mxu0 0
      %497 = vmatpush1.bf16.msra.mxu0 0
      %498 = vmatprep.subr.bf16.mxu0 0
      %499 = vmatpush1.bf16.msra.mxu0 0
      %500 = vmatprep.subr.bf16.mxu0 0
      %501 = vmatpush1.bf16.msra.mxu0 0
      %502 = vmatprep.subr.bf16.mxu0 0
      %503 = vmatpush1.bf16.msra.mxu0 0
      %504 = vmatprep.mubr.bf16.mxu0 0
      %505 = vmatmul.mubr.bf16.gmra.mrb[0].mxu0 %v470
      %v506 = vpop.f32.mrb[0].mxu0
      %v507 = vadd.f32 %v454, %v506
      %v508 = vpop.f32.mrb[0].mxu0
      %v509 = vpop.f32.mrb[0].mxu0
      %v510 = vadd.f32 %v454, %v509
      %v511 = vpop.f32.mrb[0].mxu0
      %512 = vdwg.mxu0
      %v513 = vmax.f32 %v507, 0.0
      %v514 = vmax.f32 %v510, 0.0
      %v515 = vpack.c.bf16 %v514, %v513
      %s516 = scalar_lea.vmem %s5, 16
      %v517 = vld [vmem:[%s516] sm:$0xf]
      %v518 = vld [vmem:[%s516 + $0x4] sm:$0xf]
      %v519 = vld [vmem:[%s516 + $0x8] sm:$0xf]
      %v520 = vld [vmem:[%s516 + $0xc] sm:$0xf]
      %s521 = scalar_lea.vmem %s6, 1
      %v522 = vld [vmem:[%s521] sm:$0x1]
      %v524 = vlaneseq
      %v525 = vshrl.u32 %v524, 7
      %v526 = vsub.s32 0, %v525
      %v527 = vrot.slane %v522, %v526
      %v533 = vunpack.c.l.b16 %v517
      %v534 = vunpack.c.l.b16 %v518
      %v535 = vunpack.c.l.b16 %v519
      %v536 = vunpack.c.l.b16 %v520
      %v537 = vpack.c.b16 %v534, %v533
      %v538 = vpack.c.b16 %v536, %v535
      %v542 = vsel %vm468, %v515, 0
      %544 = vmatprep.subr.bf16.mxu0 0
      %545 = vmatpush1.bf16.msra.mxu0 %v537
      %546 = vmatprep.subr.bf16.mxu0 0
      %547 = vmatpush1.bf16.msra.mxu0 %v538
      %548 = vmatprep.subr.bf16.mxu0 0
      %549 = vmatpush1.bf16.msra.mxu0 0
      %550 = vmatprep.subr.bf16.mxu0 0
      %551 = vmatpush1.bf16.msra.mxu0 0
      %552 = vmatprep.subr.bf16.mxu0 0
      %553 = vmatpush1.bf16.msra.mxu0 0
      %554 = vmatprep.subr.bf16.mxu0 0
      %555 = vmatpush1.bf16.msra.mxu0 0
      %556 = vmatprep.subr.bf16.mxu0 0
      %557 = vmatpush1.bf16.msra.mxu0 0
      %558 = vmatprep.subr.bf16.mxu0 0
      %559 = vmatpush1.bf16.msra.mxu0 0
      %560 = vmatprep.subr.bf16.mxu0 0
      %561 = vmatpush1.bf16.msra.mxu0 0
      %562 = vmatprep.subr.bf16.mxu0 0
      %563 = vmatpush1.bf16.msra.mxu0 0
      %564 = vmatprep.subr.bf16.mxu0 0
      %565 = vmatpush1.bf16.msra.mxu0 0
      %566 = vmatprep.subr.bf16.mxu0 0
      %567 = vmatpush1.bf16.msra.mxu0 0
      %568 = vmatprep.subr.bf16.mxu0 0
      %569 = vmatpush1.bf16.msra.mxu0 0
      %570 = vmatprep.subr.bf16.mxu0 0
      %571 = vmatpush1.bf16.msra.mxu0 0
      %572 = vmatprep.subr.bf16.mxu0 0
      %573 = vmatpush1.bf16.msra.mxu0 0
      %574 = vmatprep.subr.bf16.mxu0 0
      %575 = vmatpush1.bf16.msra.mxu0 0
      %576 = vmatprep.mubr.bf16.mxu0 0
      %577 = vmatmul.mubr.bf16.gmra.mrb[0].mxu0 %v542
      %v578 = vpop.f32.mrb[0].mxu0
      %v579 = vadd.f32 %v527, %v578
      %v580 = vpop.f32.mrb[0].mxu0
      %v581 = vpop.f32.mrb[0].mxu0
      %v582 = vadd.f32 %v527, %v581
      %v583 = vpop.f32.mrb[0].mxu0
      %584 = vdwg.mxu0
      %v585 = vmax.f32 %v579, 0.0
      %v586 = vmax.f32 %v582, 0.0
      %v587 = vpack.c.bf16 %v586, %v585
      %v588 = vld [vmem:[%s7] sm:$0xf]
      %v589 = vld [vmem:[%s7 + $0x4] sm:$0xf]
      %v590 = vld [vmem:[%s7 + $0x8] sm:$0xf]
      %v591 = vld [vmem:[%s7 + $0xc] sm:$0xf]
      %v592 = vld [vmem:[%s8] sm:$0x1]
      %v594 = vlaneseq
      %v595 = vshrl.u32 %v594, 7
      %v596 = vsub.s32 0, %v595
      %v597 = vrot.slane %v592, %v596
      %v603 = vunpack.c.l.b16 %v588
      %v604 = vunpack.c.l.b16 %v589
      %v605 = vunpack.c.l.b16 %v590
      %v606 = vunpack.c.l.b16 %v591
      %v607 = vpack.c.b16 %v604, %v603
      %v608 = vpack.c.b16 %v606, %v605
      %v612 = vsel %vm468, %v587, 0
      %614 = vmatprep.subr.bf16.mxu0 0
      %615 = vmatpush1.bf16.msra.mxu0 %v607
      %616 = vmatprep.subr.bf16.mxu0 0
      %617 = vmatpush1.bf16.msra.mxu0 %v608
      %618 = vmatprep.subr.bf16.mxu0 0
      %619 = vmatpush1.bf16.msra.mxu0 0
      %620 = vmatprep.subr.bf16.mxu0 0
      %621 = vmatpush1.bf16.msra.mxu0 0
      %622 = vmatprep.subr.bf16.mxu0 0
      %623 = vmatpush1.bf16.msra.mxu0 0
      %624 = vmatprep.subr.bf16.mxu0 0
      %625 = vmatpush1.bf16.msra.mxu0 0
      %626 = vmatprep.subr.bf16.mxu0 0
      %627 = vmatpush1.bf16.msra.mxu0 0
      %628 = vmatprep.subr.bf16.mxu0 0
      %629 = vmatpush1.bf16.msra.mxu0 0
      %630 = vmatprep.subr.bf16.mxu0 0
      %631 = vmatpush1.bf16.msra.mxu0 0
      %632 = vmatprep.subr.bf16.mxu0 0
      %633 = vmatpush1.bf16.msra.mxu0 0
      %634 = vmatprep.subr.bf16.mxu0 0
      %635 = vmatpush1.bf16.msra.mxu0 0
      %636 = vmatprep.subr.bf16.mxu0 0
      %637 = vmatpush1.bf16.msra.mxu0 0
      %638 = vmatprep.subr.bf16.mxu0 0
      %639 = vmatpush1.bf16.msra.mxu0 0
      %640 = vmatprep.subr.bf16.mxu0 0
      %641 = vmatpush1.bf16.msra.mxu0 0
      %642 = vmatprep.subr.bf16.mxu0 0
      %643 = vmatpush1.bf16.msra.mxu0 0
      %644 = vmatprep.subr.bf16.mxu0 0
      %645 = vmatpush1.bf16.msra.mxu0 0
      %646 = vmatprep.mubr.bf16.mxu0 0
      %647 = vmatmul.mubr.bf16.gmra.mrb[0].mxu0 %v612
      %v648 = vpop.f32.mrb[0].mxu0
      %v649 = vadd.f32 %v597, %v648
      %v650 = vpop.f32.mrb[0].mxu0
      %v651 = vpop.f32.mrb[0].mxu0
      %v652 = vadd.f32 %v597, %v651
      %v653 = vpop.f32.mrb[0].mxu0
      %654 = vdwg.mxu0
      %v655 = vrcp.pop %v361
      %v656 = vrcp.pop %v362
      %658 = vset.pattern.permute.xlu0 0
      %659 = vperm.xlu0 %658, %v655
      %v660 = vpop.permute.xlu0 %659
      %663 = vset.pattern.permute.xlu0 0
      %664 = vperm.xlu0 %663, %v656
      %v665 = vpop.permute.xlu0 %664
      %v667 = vmul.f32 %v649, %v660
      %v668 = vmul.f32 %v652, %v665
      %669 = vst.msk [vmem:[%s356] sm:$0xff] %vm384, %v667
      %670 = vst.msk [vmem:[%s356 + $0x8] sm:$0xff] %vm384, %v668
      %s671 = smul.u32 2, %s20
      %p672 = scmp.lt.s32.totalorder %s671, 7
      %s673 = scalar_select %p672, %s671, 7
      %s674 = smul.addr %s673, 8
      %s675 = scalar_lea.vmem %s9, %s674
      // Predicated region
      $region57: #{tpu_custom_call.1} parent=55 // pred_check
        %p676 = pneg %p237
      $region58: #{tpu_custom_call.1} parent=55 // pred_check_branch
        %678 = sbr.rel (%p676) target = $region60
      $region59: #{tpu_custom_call.1} parent=55 // pred_region
        %s679 = smul.u32 2, %s20
      $region60: #{tpu_custom_call.1} parent=55 // pred_fallthru
        _
    $region56: #{tpu_custom_call.1} parent=5 // pred_fallthru
      _
    %p680 = scmp.le.s32.totalorder 2, %s15
    // Predicated region
    $region61: #{tpu_custom_call.1} parent=5 // pred_check
      %p681 = pneg %p680
    $region62: #{tpu_custom_call.1} parent=5 // pred_check_branch
      %683 = sbr.rel (%p681) target = $region64
    $region63: #{tpu_custom_call.1} parent=5 // pred_region
      %s684 = ssub.s32 %s15, 2
      // Predicated region
      $region65: #{tpu_custom_call.1} parent=63 // pred_check
        %p685 = pneg %p243
      $region66: #{tpu_custom_call.1} parent=63 // pred_check_branch
        %687 = sbr.rel (%p685) target = $region68
      $region67: #{tpu_custom_call.1} parent=63 // pred_region
        %s688 = smul.u32 2, %s21
        %p689 = scmp.lt.s32.totalorder %s688, 7
        %s690 = scalar_select %p689, %s688, 7
        %s691 = smul.addr %s690, 8
        %s692 = scalar_lea.vmem %s9, %s691
      $region68: #{tpu_custom_call.1} parent=63 // pred_fallthru
        _
    $region64: #{tpu_custom_call.1} parent=5 // pred_fallthru
      _
  $region6: #{tpu_custom_call.1} parent=0 // loop_footer
    %s19 = sadd.s32 1, %s15
  $region7: #{tpu_custom_call.1} parent=0 // loop_footer_branch
    %14 = sbr.rel target = $region3
  $region8: #{tpu_custom_call.1} parent=0 // loop_exit
    _

</llo_original>
